<compile_context>
chip_gen: v7x
topology: tpu7x:2x2x1
jax: 0.10.0
libtpu: 0.0.40
codegen_flags: <defaults>
</compile_context>

<pallas_src>
import jax
import jax.numpy as jnp
from jax.experimental import pallas as pl
from jax.experimental.pallas import tpu as pltpu


def _vq_kernel(xT_ref, d_ref, dT_ref, dsq_ref, qT_ref, ind_ref, dpart_ref):
    """One grid step processes a (dim, tile) slab of flattened inputs (columns = pixels).

    xT_ref    : (dim, tile)      input columns
    d_ref     : (dim, n_embed)   codebook
    dT_ref    : (n_embed, dim)   codebook transpose (for the scores matmul)
    dsq_ref   : (n_embed, 1)     precomputed ||D_j||^2 per codeword
    qT_ref    : (dim, tile)      quantized output columns
    ind_ref   : (1, tile)        argmin codebook indices (int32), lane-dense
    dpart_ref : (1, tile)        per-column sum_d (q - x)^2, lane-dense partial sums
    """
    x = xT_ref[...]        # (dim, tile) f32
    d = d_ref[...]         # (dim, n_embed) f32
    dT = dT_ref[...]       # (n_embed, dim) f32
    dsq = dsq_ref[...]     # (n_embed, 1) f32

    # dist^T = ||D||^2 - 2 D^T x + ||x||^2   -> (n_embed, tile)
    scores = jnp.dot(dT, x, preferred_element_type=jnp.float32)   # MXU
    xsq = jnp.sum(x * x, axis=0, keepdims=True)                   # (1, tile)
    dist = dsq - 2.0 * scores + xsq                                # (n_embed, tile)

    n_embed = dist.shape[0]
    ids = jax.lax.broadcasted_iota(jnp.int32, dist.shape, 0)       # codeword ids
    min_d = jnp.min(dist, axis=0, keepdims=True)                   # (1, tile)
    # first (smallest) index achieving the minimum distance (matches argmin)
    ind = jnp.min(jnp.where(dist <= min_d, ids, n_embed), axis=0, keepdims=True)

    # codebook lookup via D @ onehot  (MXU-friendly gather), output lane-dense
    onehot = (ids == ind).astype(jnp.float32)                      # (n_embed, tile)
    q = jnp.dot(d, onehot, preferred_element_type=jnp.float32)     # (dim, tile)

    qT_ref[...] = q.astype(qT_ref.dtype)
    ind_ref[...] = ind.astype(jnp.int32)
    err = q - x
    dpart_ref[...] = jnp.sum(err * err, axis=0, keepdims=True)     # (1, tile)


def _round_up(a, b):
    return (a + b - 1) // b * b


def _vq_pallas(xT, dictionary, *, tile=1024):
    dim, n = xT.shape
    _, n_embed = dictionary.shape

    # Tile selection: lane-aligned, no bigger than (padded) N, and capped so the
    # (n_embed, tile) f32 temporaries (scores / dist / onehot) stay well under
    # the scoped-VMEM default on every generation (v7x has only 64 MiB physical).
    tile = max(128, _round_up(min(tile, n), 128))
    vmem_budget = 16 * 1024 * 1024                      # budget for the 3 big temporaries
    cap = max(128, (vmem_budget // (12 * n_embed)) // 128 * 128)
    tile = min(tile, cap)

    n_pad = _round_up(n, tile)
    if n_pad != n:
        xT = jnp.pad(xT, ((0, 0), (0, n_pad - n)))

    dT = dictionary.T                                                    # (n_embed, dim)
    dsq = jnp.sum(dictionary * dictionary, axis=0, keepdims=True).T      # (n_embed, 1)

    qT, ind, dpart = pl.pallas_call(
        _vq_kernel,
        out_shape=(
            jax.ShapeDtypeStruct((dim, n_pad), xT.dtype),
            jax.ShapeDtypeStruct((1, n_pad), jnp.int32),
            jax.ShapeDtypeStruct((1, n_pad), jnp.float32),
        ),
        grid_spec=pltpu.PrefetchScalarGridSpec(
            num_scalar_prefetch=0,
            grid=(n_pad // tile,),
            in_specs=[
                pl.BlockSpec((dim, tile), lambda i: (0, i)),
                pl.BlockSpec((dim, n_embed), lambda i: (0, 0)),
                pl.BlockSpec((n_embed, dim), lambda i: (0, 0)),
                pl.BlockSpec((n_embed, 1), lambda i: (0, 0)),
            ],
            out_specs=[
                pl.BlockSpec((dim, tile), lambda i: (0, i)),
                pl.BlockSpec((1, tile), lambda i: (0, i)),
                pl.BlockSpec((1, tile), lambda i: (0, i)),
            ],
        ),
        compiler_params=pltpu.CompilerParams(
            dimension_semantics=("parallel",)),   # no cross-step state -> megacore-friendly
    )(xT, dictionary, dT, dsq)

    return qT[:, :n], ind[0, :n], dpart[0, :n]


def vanilla_quantize_forward(x_nchw, dictionary, *, tile=1024):
    """JAX/Pallas equivalent of VanillaQuantize.forward (eval mode).

    x_nchw     : (B, dim, H, W) float32
    dictionary : (dim, n_embed) float32
    Returns the same 9-element tuple structure as the PyTorch module.
    """
    b, dim, h, w = x_nchw.shape
    n = b * h * w

    # (dim, N) layout; column index = b*H*W + h*W + w, identical ordering to the
    # reference's NHWC flatten of rows.
    xT = jnp.transpose(x_nchw, (1, 0, 2, 3)).reshape(dim, n)

    qT, ind_flat, dpart = _vq_pallas(xT, dictionary, tile=tile)

    quantize_nchw_raw = jnp.transpose(qT.reshape(dim, b, h, w), (1, 0, 2, 3))
    embed_ind = ind_flat.reshape(b, h, w)
    diff = jnp.sum(dpart) / jnp.float32(n * dim)

    # straight-through estimator (forward value identical to the quantized value)
    quantize_nchw = x_nchw + jax.lax.stop_gradient(quantize_nchw_raw - x_nchw)

    num_quantization_steps = jnp.ones((1,), jnp.float32)
    mean_D = jnp.mean(jnp.abs(dictionary))
    mean_Z = jnp.ones((1,), jnp.float32)
    norm_Z = jnp.ones((1,), jnp.float32)
    top_percentile = jnp.ones((1,), jnp.float32)
    num_zeros = jnp.zeros((1,), jnp.float32)

    # TODO(synk): training-mode EMA buffer updates (cluster_size / dictionary_avg)
    # are in-place module-buffer mutations and are not part of the eval forward.
    return (quantize_nchw,
            [diff, jnp.zeros((0,), jnp.float32)],
            embed_ind,
            num_quantization_steps,
            mean_D,
            mean_Z,
            norm_Z,
            top_percentile,
            num_zeros)


if __name__ == "__main__":
    # small shapes: B=2, dim=32 (latent size), H=W=8, n_embed=128 (dictionary size)
    B, DIM, H, W, N_EMBED = 2, 32, 8, 8, 128

    key = jax.random.PRNGKey(0)
    kx, kd = jax.random.split(key)
    x = jax.random.normal(kx, (B, DIM, H, W), dtype=jnp.float32)
    dictionary = jax.random.normal(kd, (DIM, N_EMBED), dtype=jnp.float32)  # torch.randn(dim, n_embed)

    out = vanilla_quantize_forward(x, dictionary)
    quantize, (diff, _empty), embed_ind, *_rest = out
    jax.block_until_ready(quantize)
    jax.block_until_ready(diff)
    jax.block_until_ready(embed_ind)

    # sanity check against plain-JAX reference (exact index match, f32 throughout)
    perm = jnp.transpose(x, (0, 2, 3, 1)).reshape(-1, DIM)
    dist_ref = (jnp.sum(perm ** 2, 1, keepdims=True)
                - 2.0 * perm @ dictionary
                + jnp.sum(dictionary ** 2, 0, keepdims=True))
    ind_ref = jnp.argmin(dist_ref, axis=1)
    q_ref = dictionary.T[ind_ref]
    assert jnp.array_equal(embed_ind.reshape(-1), ind_ref.astype(jnp.int32))
    assert jnp.allclose(jnp.transpose(quantize, (0, 2, 3, 1)).reshape(-1, DIM), q_ref,
                        atol=1e-5, rtol=1e-5)
    assert jnp.allclose(diff, jnp.mean((q_ref - perm) ** 2), atol=1e-5, rtol=1e-5)

    print("KERNEL_OK")
</pallas_src>

<mosaic_0001>
module attributes {stable_mosaic.version = 11 : i64} {
  func.func @_vq_kernel(%arg0: i32, %arg1: memref<32x128xf32, #tpu.memory_space<vmem>>, %arg2: memref<32x128xf32, #tpu.memory_space<vmem>>, %arg3: memref<128x32xf32, #tpu.memory_space<vmem>>, %arg4: memref<128x1xf32, #tpu.memory_space<vmem>>, %arg5: memref<32x128xf32, #tpu.memory_space<vmem>>, %arg6: memref<1x128xi32, #tpu.memory_space<vmem>>, %arg7: memref<1x128xf32, #tpu.memory_space<vmem>>) attributes {dimension_semantics = [#tpu.dimension_semantics<parallel>], iteration_bounds = array<i64: 1>, scalar_prefetch = 0 : i64, scratch_operands = 0 : i64, tpu.core_type = #tpu.core_type<tc>, window_params = [{transform_indices = @transform_0, window_bounds = array<i64: 32, 128>}, {pipeline_mode = #tpu.pipeline_mode<synchronous>, transform_indices = @transform_1, window_bounds = array<i64: 32, 128>}, {pipeline_mode = #tpu.pipeline_mode<synchronous>, transform_indices = @transform_2, window_bounds = array<i64: 128, 32>}, {pipeline_mode = #tpu.pipeline_mode<synchronous>, transform_indices = @transform_3, window_bounds = array<i64: 128, 1>}, {transform_indices = @transform_4, window_bounds = array<i64: 32, 128>}, {transform_indices = @transform_5, window_bounds = array<i64: 1, 128>}, {transform_indices = @transform_6, window_bounds = array<i64: 1, 128>}]} {
    %c0 = arith.constant 0 : index
    %c0_0 = arith.constant 0 : index
    %0 = vector.load %arg1[%c0, %c0_0] : memref<32x128xf32, #tpu.memory_space<vmem>>, vector<32x128xf32>
    %c0_1 = arith.constant 0 : index
    %c0_2 = arith.constant 0 : index
    %1 = vector.load %arg2[%c0_1, %c0_2] : memref<32x128xf32, #tpu.memory_space<vmem>>, vector<32x128xf32>
    %c0_3 = arith.constant 0 : index
    %c0_4 = arith.constant 0 : index
    %2 = vector.load %arg3[%c0_3, %c0_4] : memref<128x32xf32, #tpu.memory_space<vmem>>, vector<128x32xf32>
    %c0_5 = arith.constant 0 : index
    %c0_6 = arith.constant 0 : index
    %3 = vector.load %arg4[%c0_5, %c0_6] : memref<128x1xf32, #tpu.memory_space<vmem>>, vector<128x1xf32>
    %cst = arith.constant dense<0.000000e+00> : vector<128x128xf32>
    %4 = tpu.matmul %2, %0, %cst {dimension_numbers = #tpu.dot_dimension_numbers<[1], [0], [0], [1], [0, 0, 1, 1], [], []>} : vector<128x32xf32>, vector<32x128xf32>, vector<128x128xf32> -> vector<128x128xf32>
    %5 = arith.mulf %0, %0 : vector<32x128xf32>
    %cst_7 = arith.constant dense<0.000000e+00> : vector<128xf32>
    %6 = vector.multi_reduction <add>, %5, %cst_7 [0] : vector<32x128xf32> to vector<128xf32>
    %7 = vector.shape_cast %6 : vector<128xf32> to vector<1x128xf32>
    %cst_8 = arith.constant 2.000000e+00 : f32
    %8 = vector.broadcast %cst_8 : f32 to vector<128x128xf32>
    %9 = arith.mulf %8, %4 : vector<128x128xf32>
    %10 = vector.broadcast %3 : vector<128x1xf32> to vector<128x128xf32>
    %11 = arith.subf %10, %9 : vector<128x128xf32>
    %12 = vector.broadcast %7 : vector<1x128xf32> to vector<128x128xf32>
    %13 = arith.addf %11, %12 : vector<128x128xf32>
    %14 = tpu.iota {dimensions = array<i32: 0>} : vector<128x128xi32>
    %cst_9 = arith.constant dense<0x7F800000> : vector<128xf32>
    %15 = vector.multi_reduction <minimumf>, %13, %cst_9 [0] : vector<128x128xf32> to vector<128xf32>
    %16 = vector.shape_cast %15 : vector<128xf32> to vector<1x128xf32>
    %17 = vector.broadcast %16 : vector<1x128xf32> to vector<128x128xf32>
    %18 = arith.cmpf ole, %13, %17 : vector<128x128xf32>
    %c128_i32 = arith.constant 128 : i32
    %19 = vector.broadcast %c128_i32 : i32 to vector<128x128xi32>
    %20 = arith.select %18, %14, %19 : vector<128x128xi1>, vector<128x128xi32>
    %cst_10 = arith.constant dense<2147483647> : vector<128xi32>
    %21 = vector.multi_reduction <minsi>, %20, %cst_10 [0] : vector<128x128xi32> to vector<128xi32>
    %22 = vector.shape_cast %21 : vector<128xi32> to vector<1x128xi32>
    %23 = vector.broadcast %22 : vector<1x128xi32> to vector<128x128xi32>
    %24 = arith.cmpi eq, %14, %23 : vector<128x128xi32>
    %25 = arith.extui %24 : vector<128x128xi1> to vector<128x128xi32>
    %26 = arith.sitofp %25 : vector<128x128xi32> to vector<128x128xf32>
    %cst_11 = arith.constant dense<0.000000e+00> : vector<32x128xf32>
    %27 = tpu.matmul %1, %26, %cst_11 {dimension_numbers = #tpu.dot_dimension_numbers<[1], [0], [0], [1], [0, 0, 1, 1], [], []>} : vector<32x128xf32>, vector<128x128xf32>, vector<32x128xf32> -> vector<32x128xf32>
    %c0_12 = arith.constant 0 : index
    %c0_13 = arith.constant 0 : index
    %28 = vector.load %arg5[%c0_12, %c0_13] : memref<32x128xf32, #tpu.memory_space<vmem>>, vector<32x128xf32>
    tpu.vector_store %arg5[%c0_12, %c0_13], %27 {strides = array<i32>} : memref<32x128xf32, #tpu.memory_space<vmem>>, vector<32x128xf32>,
    %c0_14 = arith.constant 0 : index
    %c0_15 = arith.constant 0 : index
    %29 = vector.load %arg6[%c0_14, %c0_15] : memref<1x128xi32, #tpu.memory_space<vmem>>, vector<1x128xi32>
    tpu.vector_store %arg6[%c0_14, %c0_15], %22 {strides = array<i32>} : memref<1x128xi32, #tpu.memory_space<vmem>>, vector<1x128xi32>,
    %30 = arith.subf %27, %0 : vector<32x128xf32>
    %31 = arith.mulf %30, %30 : vector<32x128xf32>
    %cst_16 = arith.constant dense<0.000000e+00> : vector<128xf32>
    %32 = vector.multi_reduction <add>, %31, %cst_16 [0] : vector<32x128xf32> to vector<128xf32>
    %33 = vector.shape_cast %32 : vector<128xf32> to vector<1x128xf32>
    %c0_17 = arith.constant 0 : index
    %c0_18 = arith.constant 0 : index
    %34 = vector.load %arg7[%c0_17, %c0_18] : memref<1x128xf32, #tpu.memory_space<vmem>>, vector<1x128xf32>
    tpu.vector_store %arg7[%c0_17, %c0_18], %33 {strides = array<i32>} : memref<1x128xf32, #tpu.memory_space<vmem>>, vector<1x128xf32>,
    return
  }
  func.func @transform_0(%arg0: i32) -> (i32, i32) {
    %c0_i32 = arith.constant 0 : i32
    %c0_i32_0 = arith.constant 0 : i32
    return %c0_i32, %arg0 : i32, i32
  }
  func.func @transform_1(%arg0: i32) -> (i32, i32) {
    %c0_i32 = arith.constant 0 : i32
    %c0_i32_0 = arith.constant 0 : i32
    %c0_i32_1 = arith.constant 0 : i32
    return %c0_i32, %c0_i32_0 : i32, i32
  }
  func.func @transform_2(%arg0: i32) -> (i32, i32) {
    %c0_i32 = arith.constant 0 : i32
    %c0_i32_0 = arith.constant 0 : i32
    %c0_i32_1 = arith.constant 0 : i32
    return %c0_i32, %c0_i32_0 : i32, i32
  }
  func.func @transform_3(%arg0: i32) -> (i32, i32) {
    %c0_i32 = arith.constant 0 : i32
    %c0_i32_0 = arith.constant 0 : i32
    %c0_i32_1 = arith.constant 0 : i32
    return %c0_i32, %c0_i32_0 : i32, i32
  }
  func.func @transform_4(%arg0: i32) -> (i32, i32) {
    %c0_i32 = arith.constant 0 : i32
    %c0_i32_0 = arith.constant 0 : i32
    return %c0_i32, %arg0 : i32, i32
  }
  func.func @transform_5(%arg0: i32) -> (i32, i32) {
    %c0_i32 = arith.constant 0 : i32
    %c0_i32_0 = arith.constant 0 : i32
    return %c0_i32, %arg0 : i32, i32
  }
  func.func @transform_6(%arg0: i32) -> (i32, i32) {
    %c0_i32 = arith.constant 0 : i32
    %c0_i32_0 = arith.constant 0 : i32
    return %c0_i32, %arg0 : i32, i32
  }
}

</mosaic_0001>

<llo_original>
// kernel: tpu_custom_call.1
$region0: #{tpu_custom_call.1}
  #allocation0 [shape = 'u32[]', space=smem, size = 0x4, offset = 0x4, fixed_abs, tag = 'smem constant byte address 0x4 - core index']
  #allocation1 [shape = 'u32[144,128]{1,0:T(1,128)}', space=vmem, size = 0x12000, scoped, tag = 'internal scratch']
  %s0 = inlined_call_operand.vmem [shape: f32[32,128], index: 0, kind: input, shape index: {}]
  %s1 = inlined_call_operand.vmem [shape: f32[32,128], index: 1, kind: input, shape index: {}]
  %s2 = inlined_call_operand.vmem [shape: f32[128,32], index: 2, kind: input, shape index: {}]
  %s3 = inlined_call_operand.vmem [shape: f32[128,1], index: 3, kind: input, shape index: {}]
  %s4 = inlined_call_operand.hbm [shape: f32[32,128], index: 4, kind: output, shape index: {0}]
  %s5 = inlined_call_operand.hbm [shape: s32[1,128], index: 5, kind: output, shape index: {1}]
  %s6 = inlined_call_operand.hbm [shape: f32[1,128], index: 6, kind: output, shape index: {2}]
  %7 = xla_tuple %s4, %s5, %s6
  %s8 = sld [smem:[#allocation0]]
  $region42: #{tpu_custom_call.1} parent=0
    _
  %s10 = ssub.s32 1, %s8
  %s11 = scalar_select 0, %s10, %s8
  $region1: #{tpu_custom_call.1} parent=0
    #allocation2 [shape = 'u8[16384]{0}', space=vmem, size = 0x4000, scoped, tag = 'output window, operand 0, single buffered']
    #allocation3 [shape = 's32[1]{0}', space=sflag, size = 0x4, scoped, tag = 'scoped memory for tpu_custom_call.1']
    #allocation4 [shape = 'u8[512]{0}', space=vmem, size = 0x400, scoped, tag = 'output window, operand 1, single buffered']
    #allocation5 [shape = 's32[1]{0}', space=sflag, size = 0x4, scoped, tag = 'scoped memory for tpu_custom_call.1']
    #allocation6 [shape = 'u8[512]{0}', space=vmem, size = 0x400, scoped, tag = 'output window, operand 2, single buffered']
    %12 = vsyncpa [#allocation3], 0
    %13 = vsyncpa [#allocation5], 0
    // Predicated region
    $region2: #{tpu_custom_call.1} parent=1 // pred_check
      _
    $region3: #{tpu_custom_call.1} parent=1 // pred_check_branch
      %15 = sbr.rel (0) target = $region5
    $region4: #{tpu_custom_call.1} parent=1 // pred_region
      _
    $region5: #{tpu_custom_call.1} parent=1 // pred_fallthru
      _
    // Predicated region
    $region6: #{tpu_custom_call.1} parent=1 // pred_check
      _
    $region7: #{tpu_custom_call.1} parent=1 // pred_check_branch
      %17 = sbr.rel (0) target = $region9
    $region8: #{tpu_custom_call.1} parent=1 // pred_region
      _
    $region9: #{tpu_custom_call.1} parent=1 // pred_fallthru
      _
    // Predicated region
    $region10: #{tpu_custom_call.1} parent=1 // pred_check
      _
    $region11: #{tpu_custom_call.1} parent=1 // pred_check_branch
      %19 = sbr.rel (0) target = $region13
    $region12: #{tpu_custom_call.1} parent=1 // pred_region
      _
    $region13: #{tpu_custom_call.1} parent=1 // pred_fallthru
      _
    // Predicated region
    $region14: #{tpu_custom_call.1} parent=1 // pred_check
      _
    $region15: #{tpu_custom_call.1} parent=1 // pred_check_branch
      %21 = sbr.rel (0) target = $region17
    $region16: #{tpu_custom_call.1} parent=1 // pred_region
      _
    $region17: #{tpu_custom_call.1} parent=1 // pred_fallthru
      _
    %v22 = vld [vmem:[%s0] sm:$0xff]
    %v23 = vld [vmem:[%s0 + $0x8] sm:$0xff]
    %v24 = vld [vmem:[%s0 + $0x10] sm:$0xff]
    %v25 = vld [vmem:[%s0 + $0x18] sm:$0xff]
    %v26 = vld [vmem:[%s1] sm:$0xff]
    %v27 = vld [vmem:[%s1 + $0x8] sm:$0xff]
    %v28 = vld [vmem:[%s1 + $0x10] sm:$0xff]
    %v29 = vld [vmem:[%s1 + $0x18] sm:$0xff]
    %v30 = vld [vmem:[%s2] sm:$0xff]
    %v31 = vld [vmem:[%s2 + $0x8] sm:$0xff]
    %v32 = vld [vmem:[%s2 + $0x10] sm:$0xff]
    %v33 = vld [vmem:[%s2 + $0x18] sm:$0xff]
    %v34 = vld [vmem:[%s2 + $0x20] sm:$0xff]
    %v35 = vld [vmem:[%s2 + $0x28] sm:$0xff]
    %v36 = vld [vmem:[%s2 + $0x30] sm:$0xff]
    %v37 = vld [vmem:[%s2 + $0x38] sm:$0xff]
    %v38 = vld [vmem:[%s2 + $0x40] sm:$0xff]
    %v39 = vld [vmem:[%s2 + $0x48] sm:$0xff]
    %v40 = vld [vmem:[%s2 + $0x50] sm:$0xff]
    %v41 = vld [vmem:[%s2 + $0x58] sm:$0xff]
    %v42 = vld [vmem:[%s2 + $0x60] sm:$0xff]
    %v43 = vld [vmem:[%s2 + $0x68] sm:$0xff]
    %v44 = vld [vmem:[%s2 + $0x70] sm:$0xff]
    %v45 = vld [vmem:[%s2 + $0x78] sm:$0xff]
    %v46 = vld [vmem:[%s3] sm:$0xff]
    %v47 = vld [vmem:[%s3 + $0x8] sm:$0xff]
    %v48 = vld [vmem:[%s3 + $0x10] sm:$0xff]
    %v49 = vld [vmem:[%s3 + $0x18] sm:$0xff]
    %v50 = vld [vmem:[%s3 + $0x20] sm:$0xff]
    %v51 = vld [vmem:[%s3 + $0x28] sm:$0xff]
    %v52 = vld [vmem:[%s3 + $0x30] sm:$0xff]
    %v53 = vld [vmem:[%s3 + $0x38] sm:$0xff]
    %v54 = vld [vmem:[%s3 + $0x40] sm:$0xff]
    %v55 = vld [vmem:[%s3 + $0x48] sm:$0xff]
    %v56 = vld [vmem:[%s3 + $0x50] sm:$0xff]
    %v57 = vld [vmem:[%s3 + $0x58] sm:$0xff]
    %v58 = vld [vmem:[%s3 + $0x60] sm:$0xff]
    %v59 = vld [vmem:[%s3 + $0x68] sm:$0xff]
    %v60 = vld [vmem:[%s3 + $0x70] sm:$0xff]
    %v61 = vld [vmem:[%s3 + $0x78] sm:$0xff]
    %vm62 = vcmask 261120
    %v64 = vsel %vm62, %v30, 0
    %v67 = vsel %vm62, %v31, 0
    %v70 = vsel %vm62, %v32, 0
    %v73 = vsel %vm62, %v33, 0
    %v76 = vsel %vm62, %v34, 0
    %v79 = vsel %vm62, %v35, 0
    %v82 = vsel %vm62, %v36, 0
    %v85 = vsel %vm62, %v37, 0
    %v88 = vsel %vm62, %v38, 0
    %v91 = vsel %vm62, %v39, 0
    %v94 = vsel %vm62, %v40, 0
    %v97 = vsel %vm62, %v41, 0
    %v100 = vsel %vm62, %v42, 0
    %v103 = vsel %vm62, %v43, 0
    %v106 = vsel %vm62, %v44, 0
    %v109 = vsel %vm62, %v45, 0
    %111 = vmatprep.subr.mxu0 0.0
    %112 = vmatpush1.msra.mxu0 %v22
    %113 = vmatprep.subr.mxu0 0.0
    %114 = vmatpush1.msra.mxu0 %v23
    %115 = vmatprep.subr.mxu0 0.0
    %116 = vmatpush1.msra.mxu0 %v24
    %117 = vmatprep.subr.mxu0 0.0
    %118 = vmatpush1.msra.mxu0 %v25
    %119 = vmatprep.subr.mxu0 0.0
    %120 = vmatpush1.msra.mxu0 0.0
    %121 = vmatprep.subr.mxu0 0.0
    %122 = vmatpush1.msra.mxu0 0.0
    %123 = vmatprep.subr.mxu0 0.0
    %124 = vmatpush1.msra.mxu0 0.0
    %125 = vmatprep.subr.mxu0 0.0
    %126 = vmatpush1.msra.mxu0 0.0
    %127 = vmatprep.subr.mxu0 0.0
    %128 = vmatpush1.msra.mxu0 0.0
    %129 = vmatprep.subr.mxu0 0.0
    %130 = vmatpush1.msra.mxu0 0.0
    %131 = vmatprep.subr.mxu0 0.0
    %132 = vmatpush1.msra.mxu0 0.0
    %133 = vmatprep.subr.mxu0 0.0
    %134 = vmatpush1.msra.mxu0 0.0
    %135 = vmatprep.subr.mxu0 0.0
    %136 = vmatpush1.msra.mxu0 0.0
    %137 = vmatprep.subr.mxu0 0.0
    %138 = vmatpush1.msra.mxu0 0.0
    %139 = vmatprep.subr.mxu0 0.0
    %140 = vmatpush1.msra.mxu0 0.0
    %141 = vmatprep.subr.mxu0 0.0
    %142 = vmatpush1.msra.mxu0 0.0
    %143 = vmatprep.subr.mxu0 0.0
    %144 = vmatpush1.msra.mxu0 0.0
    %145 = vmatprep.subr.mxu0 0.0
    %146 = vmatpush1.msra.mxu0 0.0
    %147 = vmatprep.subr.mxu0 0.0
    %148 = vmatpush1.msra.mxu0 0.0
    %149 = vmatprep.subr.mxu0 0.0
    %150 = vmatpush1.msra.mxu0 0.0
    %151 = vmatprep.subr.mxu0 0.0
    %152 = vmatpush1.msra.mxu0 0.0
    %153 = vmatprep.subr.mxu0 0.0
    %154 = vmatpush1.msra.mxu0 0.0
    %155 = vmatprep.subr.mxu0 0.0
    %156 = vmatpush1.msra.mxu0 0.0
    %157 = vmatprep.subr.mxu0 0.0
    %158 = vmatpush1.msra.mxu0 0.0
    %159 = vmatprep.subr.mxu0 0.0
    %160 = vmatpush1.msra.mxu0 0.0
    %161 = vmatprep.subr.mxu0 0.0
    %162 = vmatpush1.msra.mxu0 0.0
    %163 = vmatprep.subr.mxu0 0.0
    %164 = vmatpush1.msra.mxu0 0.0
    %165 = vmatprep.subr.mxu0 0.0
    %166 = vmatpush1.msra.mxu0 0.0
    %167 = vmatprep.subr.mxu0 0.0
    %168 = vmatpush1.msra.mxu0 0.0
    %169 = vmatprep.subr.mxu0 0.0
    %170 = vmatpush1.msra.mxu0 0.0
    %171 = vmatprep.subr.mxu0 0.0
    %172 = vmatpush1.msra.mxu0 0.0
    %173 = vmatprep.subr.mxu0 0.0
    %174 = vmatpush1.msra.mxu0 0.0
    %175 = vmatprep.mubr.f32.mxu0 0.0
    %176 = vmatmul.mubr.f32.gmra.mrb[0].mxu0 %v64
    %v177 = vpop.f32.mrb[0].mxu0
    %v178 = vadd.f32 0.0, %v177
    %v179 = vpop.f32.mrb[0].mxu0
    %180 = vmatprep.mubr.f32.mxu0 0.0
    %181 = vmatmul.mubr.f32.gmra.mrb[0].mxu0 %v67
    %v182 = vpop.f32.mrb[0].mxu0
    %v183 = vadd.f32 0.0, %v182
    %v184 = vpop.f32.mrb[0].mxu0
    %185 = vmatprep.mubr.f32.mxu0 0.0
    %186 = vmatmul.mubr.f32.gmra.mrb[0].mxu0 %v70
    %v187 = vpop.f32.mrb[0].mxu0
    %v188 = vadd.f32 0.0, %v187
    %v189 = vpop.f32.mrb[0].mxu0
    %190 = vmatprep.mubr.f32.mxu0 0.0
    %191 = vmatmul.mubr.f32.gmra.mrb[0].mxu0 %v73
    %v192 = vpop.f32.mrb[0].mxu0
    %v193 = vadd.f32 0.0, %v192
    %v194 = vpop.f32.mrb[0].mxu0
    %195 = vmatprep.mubr.f32.mxu0 0.0
    %196 = vmatmul.mubr.f32.gmra.mrb[0].mxu0 %v76
    %v197 = vpop.f32.mrb[0].mxu0
    %v198 = vadd.f32 0.0, %v197
    %v199 = vpop.f32.mrb[0].mxu0
    %200 = vmatprep.mubr.f32.mxu0 0.0
    %201 = vmatmul.mubr.f32.gmra.mrb[0].mxu0 %v79
    %v202 = vpop.f32.mrb[0].mxu0
    %v203 = vadd.f32 0.0, %v202
    %v204 = vpop.f32.mrb[0].mxu0
    %205 = vmatprep.mubr.f32.mxu0 0.0
    %206 = vmatmul.mubr.f32.gmra.mrb[0].mxu0 %v82
    %v207 = vpop.f32.mrb[0].mxu0
    %v208 = vadd.f32 0.0, %v207
    %v209 = vpop.f32.mrb[0].mxu0
    %210 = vmatprep.mubr.f32.mxu0 0.0
    %211 = vmatmul.mubr.f32.gmra.mrb[0].mxu0 %v85
    %v212 = vpop.f32.mrb[0].mxu0
    %v213 = vadd.f32 0.0, %v212
    %v214 = vpop.f32.mrb[0].mxu0
    %215 = vmatprep.mubr.f32.mxu0 0.0
    %216 = vmatmul.mubr.f32.gmra.mrb[0].mxu0 %v88
    %v217 = vpop.f32.mrb[0].mxu0
    %v218 = vadd.f32 0.0, %v217
    %v219 = vpop.f32.mrb[0].mxu0
    %220 = vmatprep.mubr.f32.mxu0 0.0
    %221 = vmatmul.mubr.f32.gmra.mrb[0].mxu0 %v91
    %v222 = vpop.f32.mrb[0].mxu0
    %v223 = vadd.f32 0.0, %v222
    %v224 = vpop.f32.mrb[0].mxu0
    %225 = vmatprep.mubr.f32.mxu0 0.0
    %226 = vmatmul.mubr.f32.gmra.mrb[0].mxu0 %v94
    %v227 = vpop.f32.mrb[0].mxu0
    %v228 = vadd.f32 0.0, %v227
    %v229 = vpop.f32.mrb[0].mxu0
    %230 = vmatprep.mubr.f32.mxu0 0.0
    %231 = vmatmul.mubr.f32.gmra.mrb[0].mxu0 %v97
    %v232 = vpop.f32.mrb[0].mxu0
    %v233 = vadd.f32 0.0, %v232
    %v234 = vpop.f32.mrb[0].mxu0
    %235 = vmatprep.mubr.f32.mxu0 0.0
    %236 = vmatmul.mubr.f32.gmra.mrb[0].mxu0 %v100
    %v237 = vpop.f32.mrb[0].mxu0
    %v238 = vadd.f32 0.0, %v237
    %v239 = vpop.f32.mrb[0].mxu0
    %240 = vmatprep.mubr.f32.mxu0 0.0
    %241 = vmatmul.mubr.f32.gmra.mrb[0].mxu0 %v103
    %v242 = vpop.f32.mrb[0].mxu0
    %v243 = vadd.f32 0.0, %v242
    %v244 = vpop.f32.mrb[0].mxu0
    %245 = vmatprep.mubr.f32.mxu0 0.0
    %246 = vmatmul.mubr.f32.gmra.mrb[0].mxu0 %v106
    %v247 = vpop.f32.mrb[0].mxu0
    %v248 = vadd.f32 0.0, %v247
    %v249 = vpop.f32.mrb[0].mxu0
    %250 = vmatprep.mubr.f32.mxu0 0.0
    %251 = vmatmul.mubr.f32.gmra.mrb[0].mxu0 %v109
    %v252 = vpop.f32.mrb[0].mxu0
    %v253 = vadd.f32 0.0, %v252
    %v254 = vpop.f32.mrb[0].mxu0
    %255 = vdwg.mxu0
    %v256 = vmul.f32 %v22, %v22
    %v257 = vmul.f32 %v23, %v23
    %v258 = vmul.f32 %v24, %v24
    %v259 = vmul.f32 %v25, %v25
    %v260 = vadd.f32 %v256, %v257
    %v261 = vadd.f32 %v260, %v258
    %v262 = vadd.f32 %v261, %v259
    %v263 = vrot.slane %v262, 4
    %v264 = vadd.f32 %v262, %v263
    %v265 = vrot.slane %v264, 2
    %v266 = vadd.f32 %v264, %v265
    %v267 = vrot.slane %v266, 1
    %v268 = vadd.f32 %v266, %v267
    %v269 = vmul.f32 %v178, 2.0
    %v270 = vmul.f32 %v183, 2.0
    %v271 = vmul.f32 %v188, 2.0
    %v272 = vmul.f32 %v193, 2.0
    %v273 = vmul.f32 %v198, 2.0
    %v274 = vmul.f32 %v203, 2.0
    %v275 = vmul.f32 %v208, 2.0
    %v276 = vmul.f32 %v213, 2.0
    %v277 = vmul.f32 %v218, 2.0
    %v278 = vmul.f32 %v223, 2.0
    %v279 = vmul.f32 %v228, 2.0
    %v280 = vmul.f32 %v233, 2.0
    %v281 = vmul.f32 %v238, 2.0
    %v282 = vmul.f32 %v243, 2.0
    %v283 = vmul.f32 %v248, 2.0
    %v284 = vmul.f32 %v253, 2.0
    %286 = vset.pattern.permute.xlu0 0
    %287 = vperm.xlu0 %286, %v46
    %v288 = vpop.permute.xlu0 %287
    %291 = vset.pattern.permute.xlu0 0
    %292 = vperm.xlu0 %291, %v47
    %v293 = vpop.permute.xlu0 %292
    %296 = vset.pattern.permute.xlu0 0
    %297 = vperm.xlu0 %296, %v48
    %v298 = vpop.permute.xlu0 %297
    %301 = vset.pattern.permute.xlu0 0
    %302 = vperm.xlu0 %301, %v49
    %v303 = vpop.permute.xlu0 %302
    %306 = vset.pattern.permute.xlu0 0
    %307 = vperm.xlu0 %306, %v50
    %v308 = vpop.permute.xlu0 %307
    %311 = vset.pattern.permute.xlu0 0
    %312 = vperm.xlu0 %311, %v51
    %v313 = vpop.permute.xlu0 %312
    %316 = vset.pattern.permute.xlu0 0
    %317 = vperm.xlu0 %316, %v52
    %v318 = vpop.permute.xlu0 %317
    %321 = vset.pattern.permute.xlu0 0
    %322 = vperm.xlu0 %321, %v53
    %v323 = vpop.permute.xlu0 %322
    %326 = vset.pattern.permute.xlu0 0
    %327 = vperm.xlu0 %326, %v54
    %v328 = vpop.permute.xlu0 %327
    %331 = vset.pattern.permute.xlu0 0
    %332 = vperm.xlu0 %331, %v55
    %v333 = vpop.permute.xlu0 %332
    %336 = vset.pattern.permute.xlu0 0
    %337 = vperm.xlu0 %336, %v56
    %v338 = vpop.permute.xlu0 %337
    %341 = vset.pattern.permute.xlu0 0
    %342 = vperm.xlu0 %341, %v57
    %v343 = vpop.permute.xlu0 %342
    %346 = vset.pattern.permute.xlu0 0
    %347 = vperm.xlu0 %346, %v58
    %v348 = vpop.permute.xlu0 %347
    %351 = vset.pattern.permute.xlu0 0
    %352 = vperm.xlu0 %351, %v59
    %v353 = vpop.permute.xlu0 %352
    %356 = vset.pattern.permute.xlu0 0
    %357 = vperm.xlu0 %356, %v60
    %v358 = vpop.permute.xlu0 %357
    %361 = vset.pattern.permute.xlu0 0
    %362 = vperm.xlu0 %361, %v61
    %v363 = vpop.permute.xlu0 %362
    %v365 = vsub.f32 %v288, %v269
    %v366 = vsub.f32 %v293, %v270
    %v367 = vsub.f32 %v298, %v271
    %v368 = vsub.f32 %v303, %v272
    %v369 = vsub.f32 %v308, %v273
    %v370 = vsub.f32 %v313, %v274
    %v371 = vsub.f32 %v318, %v275
    %v372 = vsub.f32 %v323, %v276
    %v373 = vsub.f32 %v328, %v277
    %v374 = vsub.f32 %v333, %v278
    %v375 = vsub.f32 %v338, %v279
    %v376 = vsub.f32 %v343, %v280
    %v377 = vsub.f32 %v348, %v281
    %v378 = vsub.f32 %v353, %v282
    %v379 = vsub.f32 %v358, %v283
    %v380 = vsub.f32 %v363, %v284
    %v381 = vadd.f32 %v365, %v268
    %v382 = vadd.f32 %v366, %v268
    %v383 = vadd.f32 %v367, %v268
    %v384 = vadd.f32 %v368, %v268
    %v385 = vadd.f32 %v369, %v268
    %v386 = vadd.f32 %v370, %v268
    %v387 = vadd.f32 %v371, %v268
    %v388 = vadd.f32 %v372, %v268
    %v389 = vadd.f32 %v373, %v268
    %v390 = vadd.f32 %v374, %v268
    %v391 = vadd.f32 %v375, %v268
    %v392 = vadd.f32 %v376, %v268
    %v393 = vadd.f32 %v377, %v268
    %v394 = vadd.f32 %v378, %v268
    %v395 = vadd.f32 %v379, %v268
    %v396 = vadd.f32 %v380, %v268
    %v397 = vlaneseq
    %v398 = vshrl.u32 %v397, 7
    %v399 = vadd.s32 %v398, 8
    %v400 = vadd.s32 %v398, 16
    %v401 = vadd.s32 %v398, 24
    %v402 = vadd.s32 %v398, 32
    %v403 = vadd.s32 %v398, 40
    %v404 = vadd.s32 %v398, 48
    %v405 = vadd.s32 %v398, 56
    %v406 = vadd.s32 %v398, 64
    %v407 = vadd.s32 %v398, 72
    %v408 = vadd.s32 %v398, 80
    %v409 = vadd.s32 %v398, 88
    %v410 = vadd.s32 %v398, 96
    %v411 = vadd.s32 %v398, 104
    %v412 = vadd.s32 %v398, 112
    %v413 = vadd.s32 %v398, 120
    %v414 = vmin.f32 %v381, %v385
    %v415 = vmin.f32 %v382, %v386
    %v416 = vmin.f32 %v383, %v387
    %v417 = vmin.f32 %v384, %v388
    %v418 = vmin.f32 %v414, %v389
    %v419 = vmin.f32 %v415, %v390
    %v420 = vmin.f32 %v416, %v391
    %v421 = vmin.f32 %v417, %v392
    %v422 = vmin.f32 %v418, %v393
    %v423 = vmin.f32 %v419, %v394
    %v424 = vmin.f32 %v420, %v395
    %v425 = vmin.f32 %v421, %v396
    %v426 = vmin.f32 %v422, %v423
    %v427 = vmin.f32 %v424, %v425
    %v428 = vmin.f32 %v426, %v427
    %v429 = vrot.slane %v428, 4
    %v430 = vmin.f32 %v428, %v429
    %v431 = vrot.slane %v430, 2
    %v432 = vmin.f32 %v430, %v431
    %v433 = vrot.slane %v432, 1
    %v434 = vmin.f32 %v432, %v433
    %vm435 = vcmp.le.f32.partialorder %v381, %v434
    %vm436 = vcmp.le.f32.partialorder %v382, %v434
    %vm437 = vcmp.le.f32.partialorder %v383, %v434
    %vm438 = vcmp.le.f32.partialorder %v384, %v434
    %vm439 = vcmp.le.f32.partialorder %v385, %v434
    %vm440 = vcmp.le.f32.partialorder %v386, %v434
    %vm441 = vcmp.le.f32.partialorder %v387, %v434
    %vm442 = vcmp.le.f32.partialorder %v388, %v434
    %vm443 = vcmp.le.f32.partialorder %v389, %v434
    %vm444 = vcmp.le.f32.partialorder %v390, %v434
    %vm445 = vcmp.le.f32.partialorder %v391, %v434
    %vm446 = vcmp.le.f32.partialorder %v392, %v434
    %vm447 = vcmp.le.f32.partialorder %v393, %v434
    %vm448 = vcmp.le.f32.partialorder %v394, %v434
    %vm449 = vcmp.le.f32.partialorder %v395, %v434
    %vm450 = vcmp.le.f32.partialorder %v396, %v434
    %v451 = vsel %vm435, %v398, 128
    %v452 = vsel %vm436, %v399, 128
    %v453 = vsel %vm437, %v400, 128
    %v454 = vsel %vm438, %v401, 128
    %v455 = vsel %vm439, %v402, 128
    %v456 = vsel %vm440, %v403, 128
    %v457 = vsel %vm441, %v404, 128
    %v458 = vsel %vm442, %v405, 128
    %v459 = vsel %vm443, %v406, 128
    %v460 = vsel %vm444, %v407, 128
    %v461 = vsel %vm445, %v408, 128
    %v462 = vsel %vm446, %v409, 128
    %v463 = vsel %vm447, %v410, 128
    %v464 = vsel %vm448, %v411, 128
    %v465 = vsel %vm449, %v412, 128
    %v466 = vsel %vm450, %v413, 128
    %vm467 = vcmp.lt.s32.totalorder %v451, %v455
    %v468 = vsel %vm467, %v451, %v455
    %vm469 = vcmp.lt.s32.totalorder %v452, %v456
    %v470 = vsel %vm469, %v452, %v456
    %vm471 = vcmp.lt.s32.totalorder %v453, %v457
    %v472 = vsel %vm471, %v453, %v457
    %vm473 = vcmp.lt.s32.totalorder %v454, %v458
    %v474 = vsel %vm473, %v454, %v458
    %vm475 = vcmp.lt.s32.totalorder %v468, %v459
    %v476 = vsel %vm475, %v468, %v459
    %vm477 = vcmp.lt.s32.totalorder %v470, %v460
    %v478 = vsel %vm477, %v470, %v460
    %vm479 = vcmp.lt.s32.totalorder %v472, %v461
    %v480 = vsel %vm479, %v472, %v461
    %vm481 = vcmp.lt.s32.totalorder %v474, %v462
    %v482 = vsel %vm481, %v474, %v462
    %vm483 = vcmp.lt.s32.totalorder %v476, %v463
    %v484 = vsel %vm483, %v476, %v463
    %vm485 = vcmp.lt.s32.totalorder %v478, %v464
    %v486 = vsel %vm485, %v478, %v464
    %vm487 = vcmp.lt.s32.totalorder %v480, %v465
    %v488 = vsel %vm487, %v480, %v465
    %vm489 = vcmp.lt.s32.totalorder %v482, %v466
    %v490 = vsel %vm489, %v482, %v466
    %vm491 = vcmp.lt.s32.totalorder %v484, %v486
    %v492 = vsel %vm491, %v484, %v486
    %vm493 = vcmp.lt.s32.totalorder %v488, %v490
    %v494 = vsel %vm493, %v488, %v490
    %vm495 = vcmp.lt.s32.totalorder %v492, %v494
    %v496 = vsel %vm495, %v492, %v494
    %v497 = vrot.slane %v496, 4
    %vm498 = vcmp.lt.s32.totalorder %v496, %v497
    %v499 = vsel %vm498, %v496, %v497
    %v500 = vrot.slane %v499, 2
    %vm501 = vcmp.lt.s32.totalorder %v499, %v500
    %v502 = vsel %vm501, %v499, %v500
    %v503 = vrot.slane %v502, 1
    %vm504 = vcmp.lt.s32.totalorder %v502, %v503
    %v505 = vsel %vm504, %v502, %v503
    %vm506 = vcmp.eq.s32.totalorder %v398, %v505
    %vm507 = vcmp.eq.s32.totalorder %v399, %v505
    %vm508 = vcmp.eq.s32.totalorder %v400, %v505
    %vm509 = vcmp.eq.s32.totalorder %v401, %v505
    %vm510 = vcmp.eq.s32.totalorder %v402, %v505
    %vm511 = vcmp.eq.s32.totalorder %v403, %v505
    %vm512 = vcmp.eq.s32.totalorder %v404, %v505
    %vm513 = vcmp.eq.s32.totalorder %v405, %v505
    %vm514 = vcmp.eq.s32.totalorder %v406, %v505
    %vm515 = vcmp.eq.s32.totalorder %v407, %v505
    %vm516 = vcmp.eq.s32.totalorder %v408, %v505
    %vm517 = vcmp.eq.s32.totalorder %v409, %v505
    %vm518 = vcmp.eq.s32.totalorder %v410, %v505
    %vm519 = vcmp.eq.s32.totalorder %v411, %v505
    %vm520 = vcmp.eq.s32.totalorder %v412, %v505
    %vm521 = vcmp.eq.s32.totalorder %v413, %v505
    %v522 = vsel %vm506, 1, 0
    %v523 = vsel %vm507, 1, 0
    %v524 = vsel %vm508, 1, 0
    %v525 = vsel %vm509, 1, 0
    %v526 = vsel %vm510, 1, 0
    %v527 = vsel %vm511, 1, 0
    %v528 = vsel %vm512, 1, 0
    %v529 = vsel %vm513, 1, 0
    %v530 = vsel %vm514, 1, 0
    %v531 = vsel %vm515, 1, 0
    %v532 = vsel %vm516, 1, 0
    %v533 = vsel %vm517, 1, 0
    %v534 = vsel %vm518, 1, 0
    %v535 = vsel %vm519, 1, 0
    %v536 = vsel %vm520, 1, 0
    %v537 = vsel %vm521, 1, 0
    %v538 = vcvt.s32.f32 %v522
    %v539 = vcvt.s32.f32 %v523
    %v540 = vcvt.s32.f32 %v524
    %v541 = vcvt.s32.f32 %v525
    %v542 = vcvt.s32.f32 %v526
    %v543 = vcvt.s32.f32 %v527
    %v544 = vcvt.s32.f32 %v528
    %v545 = vcvt.s32.f32 %v529
    %v546 = vcvt.s32.f32 %v530
    %v547 = vcvt.s32.f32 %v531
    %v548 = vcvt.s32.f32 %v532
    %v549 = vcvt.s32.f32 %v533
    %v550 = vcvt.s32.f32 %v534
    %v551 = vcvt.s32.f32 %v535
    %v552 = vcvt.s32.f32 %v536
    %v553 = vcvt.s32.f32 %v537
    %554 = vmatprep.subr.mxu0 0.0
    %555 = vmatpush1.msra.mxu0 %v538
    %556 = vmatprep.subr.mxu0 0.0
    %557 = vmatpush1.msra.mxu0 %v539
    %558 = vmatprep.subr.mxu0 0.0
    %559 = vmatpush1.msra.mxu0 %v540
    %560 = vmatprep.subr.mxu0 0.0
    %561 = vmatpush1.msra.mxu0 %v541
    %562 = vmatprep.subr.mxu0 0.0
    %563 = vmatpush1.msra.mxu0 %v542
    %564 = vmatprep.subr.mxu0 0.0
    %565 = vmatpush1.msra.mxu0 %v543
    %566 = vmatprep.subr.mxu0 0.0
    %567 = vmatpush1.msra.mxu0 %v544
    %568 = vmatprep.subr.mxu0 0.0
    %569 = vmatpush1.msra.mxu0 %v545
    %570 = vmatprep.subr.mxu0 0.0
    %571 = vmatpush1.msra.mxu0 %v546
    %572 = vmatprep.subr.mxu0 0.0
    %573 = vmatpush1.msra.mxu0 %v547
    %574 = vmatprep.subr.mxu0 0.0
    %575 = vmatpush1.msra.mxu0 %v548
    %576 = vmatprep.subr.mxu0 0.0
    %577 = vmatpush1.msra.mxu0 %v549
    %578 = vmatprep.subr.mxu0 0.0
    %579 = vmatpush1.msra.mxu0 %v550
    %580 = vmatprep.subr.mxu0 0.0
    %581 = vmatpush1.msra.mxu0 %v551
    %582 = vmatprep.subr.mxu0 0.0
    %583 = vmatpush1.msra.mxu0 %v552
    %584 = vmatprep.subr.mxu0 0.0
    %585 = vmatpush1.msra.mxu0 %v553
    %586 = vmatprep.subr.mxu0 0.0
    %587 = vmatpush1.msra.mxu0 0.0
    %588 = vmatprep.subr.mxu0 0.0
    %589 = vmatpush1.msra.mxu0 0.0
    %590 = vmatprep.subr.mxu0 0.0
    %591 = vmatpush1.msra.mxu0 0.0
    %592 = vmatprep.subr.mxu0 0.0
    %593 = vmatpush1.msra.mxu0 0.0
    %594 = vmatprep.subr.mxu0 0.0
    %595 = vmatpush1.msra.mxu0 0.0
    %596 = vmatprep.subr.mxu0 0.0
    %597 = vmatpush1.msra.mxu0 0.0
    %598 = vmatprep.subr.mxu0 0.0
    %599 = vmatpush1.msra.mxu0 0.0
    %600 = vmatprep.subr.mxu0 0.0
    %601 = vmatpush1.msra.mxu0 0.0
    %602 = vmatprep.subr.mxu0 0.0
    %603 = vmatpush1.msra.mxu0 0.0
    %604 = vmatprep.subr.mxu0 0.0
    %605 = vmatpush1.msra.mxu0 0.0
    %606 = vmatprep.subr.mxu0 0.0
    %607 = vmatpush1.msra.mxu0 0.0
    %608 = vmatprep.subr.mxu0 0.0
    %609 = vmatpush1.msra.mxu0 0.0
    %610 = vmatprep.subr.mxu0 0.0
    %611 = vmatpush1.msra.mxu0 0.0
    %612 = vmatprep.subr.mxu0 0.0
    %613 = vmatpush1.msra.mxu0 0.0
    %614 = vmatprep.subr.mxu0 0.0
    %615 = vmatpush1.msra.mxu0 0.0
    %616 = vmatprep.subr.mxu0 0.0
    %617 = vmatpush1.msra.mxu0 0.0
    %618 = vmatprep.mubr.f32.mxu0 0.0
    %619 = vmatmul.mubr.f32.gmra.mrb[0].mxu0 %v26
    %v620 = vpop.f32.mrb[0].mxu0
    %v621 = vadd.f32 0.0, %v620
    %v622 = vpop.f32.mrb[0].mxu0
    %623 = vmatprep.mubr.f32.mxu0 0.0
    %624 = vmatmul.mubr.f32.gmra.mrb[0].mxu0 %v27
    %v625 = vpop.f32.mrb[0].mxu0
    %v626 = vadd.f32 0.0, %v625
    %v627 = vpop.f32.mrb[0].mxu0
    %628 = vmatprep.mubr.f32.mxu0 0.0
    %629 = vmatmul.mubr.f32.gmra.mrb[0].mxu0 %v28
    %v630 = vpop.f32.mrb[0].mxu0
    %v631 = vadd.f32 0.0, %v630
    %v632 = vpop.f32.mrb[0].mxu0
    %633 = vmatprep.mubr.f32.mxu0 0.0
    %634 = vmatmul.mubr.f32.gmra.mrb[0].mxu0 %v29
    %v635 = vpop.f32.mrb[0].mxu0
    %v636 = vadd.f32 0.0, %v635
    %v637 = vpop.f32.mrb[0].mxu0
    %638 = vdwg.mxu0
    %639 = vst [vmem:[#allocation2] sm:$0xff] %v621
    %640 = vst [vmem:[#allocation2 + $0x8] sm:$0xff] %v626
    %641 = vst [vmem:[#allocation2 + $0x10] sm:$0xff] %v631
    %642 = vst [vmem:[#allocation2 + $0x18] sm:$0xff] %v636
    %643 = vst [vmem:[#allocation4] sm:$0x1] %v505
    %v644 = vsub.f32 %v621, %v22
    %v645 = vsub.f32 %v626, %v23
    %v646 = vsub.f32 %v631, %v24
    %v647 = vsub.f32 %v636, %v25
    %v648 = vmul.f32 %v644, %v644
    %v649 = vmul.f32 %v645, %v645
    %v650 = vmul.f32 %v646, %v646
    %v651 = vmul.f32 %v647, %v647
    %v652 = vadd.f32 %v648, %v649
    %v653 = vadd.f32 %v652, %v650
    %v654 = vadd.f32 %v653, %v651
    %v655 = vrot.slane %v654, 4
    %v656 = vadd.f32 %v654, %v655
    %v657 = vrot.slane %v656, 2
    %v658 = vadd.f32 %v656, %v657
    %v659 = vrot.slane %v658, 1
    %v660 = vadd.f32 %v658, %v659
    %661 = vst [vmem:[#allocation6] sm:$0x1] %v660
    // Predicated region
    $region18: #{tpu_custom_call.1} parent=1 // pred_check
      _
    $region19: #{tpu_custom_call.1} parent=1 // pred_check_branch
      %663 = sbr.rel (0) target = $region21
    $region20: #{tpu_custom_call.1} parent=1 // pred_region
      %s665 = ssub.s32 512, 512
      %666 = vsyncadd [#allocation3], %s665
      %s667 = sshll.u32 [#allocation2], 4
      %s668 = int_to_ptr.vmem [resolvable:$true] %s667
      %673 = dma.vmem_to_hbm [thread:$0]  %s668, 512, %s4, [#allocation3], 128, 128, 8
    $region21: #{tpu_custom_call.1} parent=1 // pred_fallthru
      _
    // Predicated region
    $region22: #{tpu_custom_call.1} parent=1 // pred_check
      _
    $region23: #{tpu_custom_call.1} parent=1 // pred_check_branch
      %675 = sbr.rel (0) target = $region25
    $region24: #{tpu_custom_call.1} parent=1 // pred_region
      %s677 = ssub.s32 16, 16
      %678 = vsyncadd [#allocation5], %s677
      %s680 = sshll.u32 [#allocation4], 4
      %s681 = int_to_ptr.vmem [resolvable:$true] %s680
      %683 = dma.vmem_to_hbm [thread:$0]  %s681, 16, %s5, [#allocation5]
    $region25: #{tpu_custom_call.1} parent=1 // pred_fallthru
      _
    // Predicated region
    $region26: #{tpu_custom_call.1} parent=1 // pred_check
      _
    $region27: #{tpu_custom_call.1} parent=1 // pred_check_branch
      %685 = sbr.rel (0) target = $region29
    $region28: #{tpu_custom_call.1} parent=1 // pred_region
      %s687 = ssub.s32 16, 16
      %688 = vsyncadd [#allocation5], %s687
      %s690 = sshll.u32 [#allocation6], 4
      %s691 = int_to_ptr.vmem [resolvable:$true] %s690
      %693 = dma.vmem_to_hbm [thread:$0]  %s691, 16, %s6, [#allocation5]
    $region29: #{tpu_custom_call.1} parent=1 // pred_fallthru
      _
    // Predicated region
    $region30: #{tpu_custom_call.1} parent=1 // pred_check
      _
    $region31: #{tpu_custom_call.1} parent=1 // pred_check_branch
      %695 = sbr.rel (0) target = $region33
    $region32: #{tpu_custom_call.1} parent=1 // pred_region
      %696 = dma.done [#allocation3], 512
    $region33: #{tpu_custom_call.1} parent=1 // pred_fallthru
      _
    // Predicated region
    $region34: #{tpu_custom_call.1} parent=1 // pred_check
      _
    $region35: #{tpu_custom_call.1} parent=1 // pred_check_branch
      %698 = sbr.rel (0) target = $region37
    $region36: #{tpu_custom_call.1} parent=1 // pred_region
      %699 = dma.done [#allocation5], 16
    $region37: #{tpu_custom_call.1} parent=1 // pred_fallthru
      _
    // Predicated region
    $region38: #{tpu_custom_call.1} parent=1 // pred_check
      _
    $region39: #{tpu_custom_call.1} parent=1 // pred_check_branch
      %701 = sbr.rel (0) target = $region41
    $region40: #{tpu_custom_call.1} parent=1 // pred_region
      %702 = dma.done [#allocation5], 16
    $region41: #{tpu_custom_call.1} parent=1 // pred_fallthru
      _
    %703 = vsyncpa [#allocation3], 1
    %704 = vsyncpa [#allocation5], 1

</llo_original>
